<compile_context>
chip_gen: v5e
topology: v5e:2x2
jax: 0.10.0
libtpu: 0.0.40
codegen_flags: <defaults>
</compile_context>

<pallas_src>
import jax
import jax.numpy as jnp
from jax.experimental import pallas as pl
from jax.experimental.pallas import tpu as pltpu


def _round_up(x: int, m: int) -> int:
    return ((x + m - 1) // m) * m


def _linear_relu_kernel(x_ref, w_ref, b_ref, o_ref):
    # x_ref: (TM, Dp)  activation tile (compute dtype, e.g. bf16)
    # w_ref: (Dp, Dp)  weight in [in, out] layout (pre-transposed), VMEM-resident
    # b_ref: (1, Dp)   bias (f32)
    # o_ref: (TM, Dp)  output tile (output dtype)
    acc = jnp.dot(x_ref[...], w_ref[...], preferred_element_type=jnp.float32)
    acc = acc + b_ref[...]                       # broadcast (1, Dp) over rows, f32
    o_ref[...] = jnp.maximum(acc, 0.0).astype(o_ref.dtype)


def symbolic_reasoning_forward(x, weight, bias, *, compute_dtype=jnp.bfloat16):
    """x: [..., D]; weight: [D, D] (PyTorch out x in); bias: [D]."""
    orig_shape = x.shape
    d_out, d_in = weight.shape
    assert d_out == d_in, "SymbolicReasoningModule uses a square rule layer"
    D = d_in

    x2d = x.reshape(-1, D)
    N = x2d.shape[0]
    out_dtype = x.dtype

    cd_size = jnp.dtype(compute_dtype).itemsize
    out_size = jnp.dtype(out_dtype).itemsize
    # Minimum sublane tile: 8 rows for 32-bit, 16 rows for packed (bf16) dtypes.
    row_align = 8 if cd_size >= 4 else 16

    # Lane-dense feature padding (contraction + output dims) to a multiple of 128.
    Dp = _round_up(D, 128)

    # Row tile: largest of {1024, 512, 256, ...} whose double-buffered x/out
    # tiles plus the single-buffered resident weight fit a 48 MiB VMEM budget.
    VMEM_BUDGET = 48 << 20
    w_bytes = Dp * Dp * cd_size
    TM = 1024
    while TM > row_align and (2 * TM * Dp * (cd_size + out_size) + w_bytes) > VMEM_BUDGET:
        TM //= 2
    TM = min(TM, _round_up(N, row_align))     # never larger than the (aligned) row count

    # Rows presented to the grid: pad only when the whole input is smaller than
    # one tile (a handful of rows); otherwise let Pallas mask the ragged last
    # block (OOB reads ignored, OOB writes dropped) — no full activation copy.
    Np_rows = TM if N < TM else N
    grid = (pl.cdiv(Np_rows, TM),)

    # One-time wrapper-side transforms: cast to the MXU compute dtype, transpose
    # W to [in, out] (constant-folds for frozen weights), pad feature dim if needed.
    x_c = x2d.astype(compute_dtype)
    w_c = weight.astype(compute_dtype).T          # [in, out]
    b_p = bias.astype(jnp.float32)
    pad_rows = Np_rows - N
    pad_cols = Dp - D
    if pad_rows or pad_cols:
        x_c = jnp.pad(x_c, ((0, pad_rows), (0, pad_cols)))
    if pad_cols:
        w_c = jnp.pad(w_c, ((0, pad_cols), (0, pad_cols)))
        b_p = jnp.pad(b_p, (0, pad_cols))
    b_p = b_p.reshape(1, Dp)

    # Explicit VMEM budget (never below the default scoped limit, capped ~100 MiB).
    vmem_est = (2 * TM * Dp * cd_size        # double-buffered x tiles
                + 2 * TM * Dp * out_size     # double-buffered out tiles
                + w_bytes                    # resident weight
                + 2 * Dp * 4)                # bias
    vmem_limit = int(min(max(2 * vmem_est + (4 << 20), 32 << 20), 100 << 20))

    cost = pl.CostEstimate(
        flops=2 * Np_rows * Dp * Dp,
        transcendentals=0,
        bytes_accessed=(Np_rows * Dp * cd_size          # x in
                        + Dp * Dp * cd_size             # W in
                        + Dp * 4                        # bias in
                        + Np_rows * Dp * out_size),     # out
    )

    def _call(single_buffer_resident: bool):
        resident_kwargs = (
            dict(pipeline_mode=pl.Buffered(1)) if single_buffer_resident else {}
        )
        grid_spec = pltpu.PrefetchScalarGridSpec(
            num_scalar_prefetch=0,
            grid=grid,
            in_specs=[
                pl.BlockSpec((TM, Dp), lambda i: (i, 0)),                      # x: row-tiled
                pl.BlockSpec((Dp, Dp), lambda i: (0, 0), **resident_kwargs),   # W: resident
                pl.BlockSpec((1, Dp), lambda i: (0, 0), **resident_kwargs),    # b: resident
            ],
            out_specs=pl.BlockSpec((TM, Dp), lambda i: (i, 0)),
        )
        return pl.pallas_call(
            _linear_relu_kernel,
            out_shape=jax.ShapeDtypeStruct((Np_rows, Dp), out_dtype),
            grid_spec=grid_spec,
            compiler_params=pltpu.CompilerParams(
                dimension_semantics=("parallel",),
                vmem_limit_bytes=vmem_limit,
            ),
            cost_estimate=cost,
        )(x_c, w_c, b_p)

    try:
        out_p = _call(True)
    except Exception:
        # Fallback for toolchains that reject pipeline_mode=pl.Buffered(1) on a
        # constant-index BlockSpec; only costs VMEM (weight double-buffered).
        out_p = _call(False)

    if pad_rows or pad_cols:
        out_p = out_p[:N, :D]
    return out_p.reshape(orig_shape)


if __name__ == "__main__":
    batch, seq, embedding_dim = 2, 8, 32

    key = jax.random.PRNGKey(0)
    k_x, k_w, k_b = jax.random.split(key, 3)

    # Deterministic parameter init (synthetic; mimics nn.Linear's uniform init range).
    bound = 1.0 / (embedding_dim ** 0.5)
    weight = jax.random.uniform(k_w, (embedding_dim, embedding_dim),
                                minval=-bound, maxval=bound, dtype=jnp.float32)
    bias = jax.random.uniform(k_b, (embedding_dim,),
                              minval=-bound, maxval=bound, dtype=jnp.float32)
    x = jax.random.normal(k_x, (batch, seq, embedding_dim), dtype=jnp.float32)

    out = symbolic_reasoning_forward(x, weight, bias)
    out = jax.block_until_ready(out)

    # Reference (nn.Linear semantics: x @ W^T + b, then ReLU).  The kernel feeds
    # the MXU bf16, so check tightly against the bf16-rounded-input reference and
    # loosely against the pure-f32 reference.
    x_bf = x.astype(jnp.bfloat16).astype(jnp.float32)
    w_bf = weight.astype(jnp.bfloat16).astype(jnp.float32)
    ref_bf = jnp.maximum(
        jnp.einsum("bsd,od->bso", x_bf, w_bf, preferred_element_type=jnp.float32) + bias, 0.0)
    ref_f32 = jnp.maximum(
        jnp.einsum("bsd,od->bso", x, weight, preferred_element_type=jnp.float32) + bias, 0.0)

    assert out.shape == (batch, seq, embedding_dim)
    assert jnp.allclose(out, ref_bf, atol=2e-3, rtol=2e-3), "mismatch vs bf16-input reference"
    assert jnp.allclose(out, ref_f32, atol=5e-2, rtol=5e-2), "mismatch vs f32 reference"

    print("KERNEL_OK")
</pallas_src>

<mosaic_0001>
module attributes {stable_mosaic.version = 11 : i64} {
  func.func @_linear_relu_kernel(%arg0: i32, %arg1: memref<16x128xbf16, #tpu.memory_space<vmem>>, %arg2: memref<128x128xbf16, #tpu.memory_space<vmem>>, %arg3: memref<1x128xf32, #tpu.memory_space<vmem>>, %arg4: memref<16x128xf32, #tpu.memory_space<vmem>>) attributes {dimension_semantics = [#tpu.dimension_semantics<parallel>], iteration_bounds = array<i64: 1>, scalar_prefetch = 0 : i64, scratch_operands = 0 : i64, tpu.core_type = #tpu.core_type<tc>, window_params = [{transform_indices = @transform_0, window_bounds = array<i64: 16, 128>}, {pipeline_mode = #tpu.pipeline_mode<synchronous>, transform_indices = @transform_1, window_bounds = array<i64: 128, 128>}, {pipeline_mode = #tpu.pipeline_mode<synchronous>, transform_indices = @transform_2, window_bounds = array<i64: 1, 128>}, {transform_indices = @transform_3, window_bounds = array<i64: 16, 128>}]} {
    %c0 = arith.constant 0 : index
    %c0_0 = arith.constant 0 : index
    %0 = vector.load %arg1[%c0, %c0_0] : memref<16x128xbf16, #tpu.memory_space<vmem>>, vector<16x128xbf16>
    %c0_1 = arith.constant 0 : index
    %c0_2 = arith.constant 0 : index
    %1 = vector.load %arg2[%c0_1, %c0_2] : memref<128x128xbf16, #tpu.memory_space<vmem>>, vector<128x128xbf16>
    %cst = arith.constant dense<0.000000e+00> : vector<16x128xf32>
    %2 = tpu.matmul %0, %1, %cst {dimension_numbers = #tpu.dot_dimension_numbers<[1], [0], [0], [1], [0, 0, 1, 1], [], []>} : vector<16x128xbf16>, vector<128x128xbf16>, vector<16x128xf32> -> vector<16x128xf32>
    %c0_3 = arith.constant 0 : index
    %c0_4 = arith.constant 0 : index
    %3 = vector.load %arg3[%c0_3, %c0_4] : memref<1x128xf32, #tpu.memory_space<vmem>>, vector<1x128xf32>
    %4 = vector.broadcast %3 : vector<1x128xf32> to vector<16x128xf32>
    %5 = arith.addf %2, %4 : vector<16x128xf32>
    %cst_5 = arith.constant 0.000000e+00 : f32
    %6 = vector.broadcast %cst_5 : f32 to vector<16x128xf32>
    %7 = arith.maximumf %5, %6 : vector<16x128xf32>
    %c0_6 = arith.constant 0 : index
    %c0_7 = arith.constant 0 : index
    %8 = vector.load %arg4[%c0_6, %c0_7] : memref<16x128xf32, #tpu.memory_space<vmem>>, vector<16x128xf32>
    tpu.vector_store %arg4[%c0_6, %c0_7], %7 {strides = array<i32>} : memref<16x128xf32, #tpu.memory_space<vmem>>, vector<16x128xf32>,
    return
  }
  func.func @transform_0(%arg0: i32) -> (i32, i32) {
    %c0_i32 = arith.constant 0 : i32
    %c0_i32_0 = arith.constant 0 : i32
    return %arg0, %c0_i32 : i32, i32
  }
  func.func @transform_1(%arg0: i32) -> (i32, i32) {
    %c0_i32 = arith.constant 0 : i32
    %c0_i32_0 = arith.constant 0 : i32
    %c0_i32_1 = arith.constant 0 : i32
    return %c0_i32, %c0_i32_0 : i32, i32
  }
  func.func @transform_2(%arg0: i32) -> (i32, i32) {
    %c0_i32 = arith.constant 0 : i32
    %c0_i32_0 = arith.constant 0 : i32
    %c0_i32_1 = arith.constant 0 : i32
    return %c0_i32, %c0_i32_0 : i32, i32
  }
  func.func @transform_3(%arg0: i32) -> (i32, i32) {
    %c0_i32 = arith.constant 0 : i32
    %c0_i32_0 = arith.constant 0 : i32
    return %arg0, %c0_i32 : i32, i32
  }
}

module attributes {stable_mosaic.version = 11 : i64} {
  func.func @_linear_relu_kernel(%arg0: i32, %arg1: memref<16x128xbf16, #tpu.memory_space<vmem>>, %arg2: memref<128x128xbf16, #tpu.memory_space<vmem>>, %arg3: memref<1x128xf32, #tpu.memory_space<vmem>>, %arg4: memref<16x128xf32, #tpu.memory_space<vmem>>) attributes {dimension_semantics = [#tpu.dimension_semantics<parallel>], iteration_bounds = array<i64: 1>, scalar_prefetch = 0 : i64, scratch_operands = 0 : i64, tpu.core_type = #tpu.core_type<tc>, window_params = [{transform_indices = @transform_0, window_bounds = array<i64: 16, 128>}, {pipeline_mode = #tpu.pipeline_mode<synchronous>, transform_indices = @transform_1, window_bounds = array<i64: 128, 128>}, {pipeline_mode = #tpu.pipeline_mode<synchronous>, transform_indices = @transform_2, window_bounds = array<i64: 1, 128>}, {transform_indices = @transform_3, window_bounds = array<i64: 16, 128>}]} {
    %c0 = arith.constant 0 : index
    %c0_0 = arith.constant 0 : index
    %0 = vector.load %arg1[%c0, %c0_0] : memref<16x128xbf16, #tpu.memory_space<vmem>>, vector<16x128xbf16>
    %c0_1 = arith.constant 0 : index
    %c0_2 = arith.constant 0 : index
    %1 = vector.load %arg2[%c0_1, %c0_2] : memref<128x128xbf16, #tpu.memory_space<vmem>>, vector<128x128xbf16>
    %cst = arith.constant dense<0.000000e+00> : vector<16x128xf32>
    %2 = tpu.matmul %0, %1, %cst {dimension_numbers = #tpu.dot_dimension_numbers<[1], [0], [0], [1], [0, 0, 1, 1], [], []>} : vector<16x128xbf16>, vector<128x128xbf16>, vector<16x128xf32> -> vector<16x128xf32>
    %c0_3 = arith.constant 0 : index
    %c0_4 = arith.constant 0 : index
    %3 = vector.load %arg3[%c0_3, %c0_4] : memref<1x128xf32, #tpu.memory_space<vmem>>, vector<1x128xf32>
    %4 = vector.broadcast %3 : vector<1x128xf32> to vector<16x128xf32>
    %5 = arith.addf %2, %4 : vector<16x128xf32>
    %cst_5 = arith.constant 0.000000e+00 : f32
    %6 = vector.broadcast %cst_5 : f32 to vector<16x128xf32>
    %7 = arith.maximumf %5, %6 : vector<16x128xf32>
    %c0_6 = arith.constant 0 : index
    %c0_7 = arith.constant 0 : index
    %8 = vector.load %arg4[%c0_6, %c0_7] : memref<16x128xf32, #tpu.memory_space<vmem>>, vector<16x128xf32>
    tpu.vector_store %arg4[%c0_6, %c0_7], %7 {strides = array<i32>} : memref<16x128xf32, #tpu.memory_space<vmem>>, vector<16x128xf32>,
    return
  }
  func.func @transform_0(%arg0: i32) -> (i32, i32) {
    %c0_i32 = arith.constant 0 : i32
    %c0_i32_0 = arith.constant 0 : i32
    return %arg0, %c0_i32 : i32, i32
  }
  func.func @transform_1(%arg0: i32) -> (i32, i32) {
    %c0_i32 = arith.constant 0 : i32
    %c0_i32_0 = arith.constant 0 : i32
    %c0_i32_1 = arith.constant 0 : i32
    return %c0_i32, %c0_i32_0 : i32, i32
  }
  func.func @transform_2(%arg0: i32) -> (i32, i32) {
    %c0_i32 = arith.constant 0 : i32
    %c0_i32_0 = arith.constant 0 : i32
    %c0_i32_1 = arith.constant 0 : i32
    return %c0_i32, %c0_i32_0 : i32, i32
  }
  func.func @transform_3(%arg0: i32) -> (i32, i32) {
    %c0_i32 = arith.constant 0 : i32
    %c0_i32_0 = arith.constant 0 : i32
    return %arg0, %c0_i32 : i32, i32
  }
}

</mosaic_0001>

<llo_original>
// kernel: tpu_custom_call.1
$region0: #{tpu_custom_call.1}
  #allocation0 [shape = 'u32[]', space=smem, size = 0x4, offset = 0x4, fixed_abs, tag = 'smem constant byte address 0x4 - core index']
  #allocation1 [shape = 'u32[72,128]{1,0:T(1,128)}', space=vmem, size = 0x9000, scoped, tag = 'internal scratch']
  %s0 = inlined_call_operand.hbm [shape: bf16[16,128], index: 0, kind: input, shape index: {}]
  %s1 = inlined_call_operand.hbm [shape: bf16[128,128], index: 1, kind: input, shape index: {}]
  %s2 = inlined_call_operand.vmem [shape: f32[1,128], index: 2, kind: input, shape index: {}]
  %s3 = inlined_call_operand.hbm [shape: f32[16,128], index: 3, kind: output, shape index: {}]
  %s4 = sld [smem:[#allocation0]]
  $region30: #{tpu_custom_call.1} parent=0
    _
  %s6 = ssub.s32 1, %s4
  %s7 = scalar_select 0, %s6, %s4
  $region1: #{tpu_custom_call.1} parent=0
    #allocation2 [shape = 'u8[4096]{0}', space=vmem, size = 0x1000, scoped, tag = 'input window, operand 0, single buffered']
    #allocation3 [shape = 's32[1]{0}', space=sflag, size = 0x4, scoped, tag = 'scoped memory for tpu_custom_call.1']
    #allocation4 [shape = 's32[1]{0}', space=sflag, size = 0x4, scoped, tag = 'scoped memory for tpu_custom_call.1']
    #allocation5 [shape = 'u8[32768]{0}', space=vmem, size = 0x8000, scoped, tag = 'input window, operand 1, single buffered']
    #allocation6 [shape = 's32[1]{0}', space=sflag, size = 0x4, scoped, tag = 'scoped memory for tpu_custom_call.1']
    #allocation7 [shape = 'u8[8192]{0}', space=vmem, size = 0x2000, scoped, tag = 'output window, operand 0, single buffered']
    %8 = vsyncpa [#allocation3], 0
    %9 = vsyncpa [#allocation6], 0
    %10 = vsyncpa [#allocation4], 0
    // Predicated region
    $region2: #{tpu_custom_call.1} parent=1 // pred_check
      _
    $region3: #{tpu_custom_call.1} parent=1 // pred_check_branch
      %12 = sbr.rel (0) target = $region5
    $region4: #{tpu_custom_call.1} parent=1 // pred_region
      %14 = vsyncadd [#allocation3], 0
      %s15 = sshll.u32 %s0, 4
      %s16 = int_to_ptr.hbm [resolvable:$true] %s15
      %s17 = sshll.u32 [#allocation2], 4
      %s18 = int_to_ptr.vmem [resolvable:$true] %s17
      %23 = dma.hbm_to_vmem [thread:$0]  %s16, 128, %s18, [#allocation3], 64, 64, 4
    $region5: #{tpu_custom_call.1} parent=1 // pred_fallthru
      _
    // Predicated region
    $region6: #{tpu_custom_call.1} parent=1 // pred_check
      _
    $region7: #{tpu_custom_call.1} parent=1 // pred_check_branch
      %25 = sbr.rel (0) target = $region9
    $region8: #{tpu_custom_call.1} parent=1 // pred_region
      %27 = vsyncadd [#allocation6], 0
      %s28 = sshll.u32 %s1, 4
      %s29 = int_to_ptr.hbm [resolvable:$true] %s28
      %s30 = sshll.u32 [#allocation5], 4
      %s31 = int_to_ptr.vmem [resolvable:$true] %s30
      %36 = dma.hbm_to_vmem [thread:$0]  %s29, 1024, %s31, [#allocation6], 64, 64, 4
    $region9: #{tpu_custom_call.1} parent=1 // pred_fallthru
      _
    // Predicated region
    $region10: #{tpu_custom_call.1} parent=1 // pred_check
      _
    $region11: #{tpu_custom_call.1} parent=1 // pred_check_branch
      %38 = sbr.rel (0) target = $region13
    $region12: #{tpu_custom_call.1} parent=1 // pred_region
      _
    $region13: #{tpu_custom_call.1} parent=1 // pred_fallthru
      _
    // Predicated region
    $region14: #{tpu_custom_call.1} parent=1 // pred_check
      _
    $region15: #{tpu_custom_call.1} parent=1 // pred_check_branch
      %40 = sbr.rel (0) target = $region17
    $region16: #{tpu_custom_call.1} parent=1 // pred_region
      %42 = dma.done [#allocation3], 128
    $region17: #{tpu_custom_call.1} parent=1 // pred_fallthru
      _
    // Predicated region
    $region18: #{tpu_custom_call.1} parent=1 // pred_check
      _
    $region19: #{tpu_custom_call.1} parent=1 // pred_check_branch
      %44 = sbr.rel (0) target = $region21
    $region20: #{tpu_custom_call.1} parent=1 // pred_region
      %46 = dma.done [#allocation6], 1024
    $region21: #{tpu_custom_call.1} parent=1 // pred_fallthru
      _
    %v47 = vld [vmem:[#allocation2] sm:$0xf]
    %v48 = vld [vmem:[#allocation2 + $0x4] sm:$0xf]
    %v49 = vld [vmem:[#allocation5] sm:$0xf]
    %v50 = vld [vmem:[#allocation5 + $0x4] sm:$0xf]
    %v51 = vld [vmem:[#allocation5 + $0x8] sm:$0xf]
    %v52 = vld [vmem:[#allocation5 + $0xc] sm:$0xf]
    %v53 = vld [vmem:[#allocation5 + $0x10] sm:$0xf]
    %v54 = vld [vmem:[#allocation5 + $0x14] sm:$0xf]
    %v55 = vld [vmem:[#allocation5 + $0x18] sm:$0xf]
    %v56 = vld [vmem:[#allocation5 + $0x1c] sm:$0xf]
    %v57 = vld [vmem:[#allocation5 + $0x20] sm:$0xf]
    %v58 = vld [vmem:[#allocation5 + $0x24] sm:$0xf]
    %v59 = vld [vmem:[#allocation5 + $0x28] sm:$0xf]
    %v60 = vld [vmem:[#allocation5 + $0x2c] sm:$0xf]
    %v61 = vld [vmem:[#allocation5 + $0x30] sm:$0xf]
    %v62 = vld [vmem:[#allocation5 + $0x34] sm:$0xf]
    %v63 = vld [vmem:[#allocation5 + $0x38] sm:$0xf]
    %v64 = vld [vmem:[#allocation5 + $0x3c] sm:$0xf]
    %v65 = vld [vmem:[%s2] sm:$0x1]
    %v67 = vperm.slane %v65, 0
    %v71 = vunpack.c.l.b16 %v47
    %v72 = vunpack.c.l.b16 %v48
    %v73 = vpack.c.b16 %v72, %v71
    %v91 = vunpack.c.l.b16 %v49
    %v92 = vunpack.c.l.b16 %v50
    %v93 = vunpack.c.l.b16 %v51
    %v94 = vunpack.c.l.b16 %v52
    %v95 = vunpack.c.l.b16 %v53
    %v96 = vunpack.c.l.b16 %v54
    %v97 = vunpack.c.l.b16 %v55
    %v98 = vunpack.c.l.b16 %v56
    %v99 = vunpack.c.l.b16 %v57
    %v100 = vunpack.c.l.b16 %v58
    %v101 = vunpack.c.l.b16 %v59
    %v102 = vunpack.c.l.b16 %v60
    %v103 = vunpack.c.l.b16 %v61
    %v104 = vunpack.c.l.b16 %v62
    %v105 = vunpack.c.l.b16 %v63
    %v106 = vunpack.c.l.b16 %v64
    %v107 = vpack.c.b16 %v92, %v91
    %v108 = vpack.c.b16 %v94, %v93
    %v109 = vpack.c.b16 %v96, %v95
    %v110 = vpack.c.b16 %v98, %v97
    %v111 = vpack.c.b16 %v100, %v99
    %v112 = vpack.c.b16 %v102, %v101
    %v113 = vpack.c.b16 %v104, %v103
    %v114 = vpack.c.b16 %v106, %v105
    %123 = vmatpush.bf16.msra.mxu0 %v114
    %124 = vmatpush.bf16.msra.mxu0 %v113
    %125 = vmatpush.bf16.msra.mxu0 %v112
    %126 = vmatpush.bf16.msra.mxu0 %v111
    %127 = vmatpush.bf16.msra.mxu0 %v110
    %128 = vmatpush.bf16.msra.mxu0 %v109
    %129 = vmatpush.bf16.msra.mxu0 %v108
    %130 = vmatpush.bf16.msra.mxu0 %v107
    %131 = vmatmul.bf16.gmra.mxu0 %v73
    %v132 = vpop.f32.mrf.mxu0
    %v133 = vadd.f32 %v67, %v132
    %v134 = vpop.f32.mrf.mxu0
    %v135 = vadd.f32 %v67, %v134
    %136 = vdwg.mxu0
    %v137 = vmax.f32 %v133, 0.0
    %v138 = vmax.f32 %v135, 0.0
    %139 = vst [vmem:[#allocation7] sm:$0xff] %v137
    %140 = vst [vmem:[#allocation7 + $0x8] sm:$0xff] %v138
    // Predicated region
    $region22: #{tpu_custom_call.1} parent=1 // pred_check
      _
    $region23: #{tpu_custom_call.1} parent=1 // pred_check_branch
      %142 = sbr.rel (0) target = $region25
    $region24: #{tpu_custom_call.1} parent=1 // pred_region
      %144 = vsyncadd [#allocation4], 0
      %s145 = sshll.u32 [#allocation7], 4
      %s146 = int_to_ptr.vmem [resolvable:$true] %s145
      %s147 = sshll.u32 %s3, 4
      %s148 = int_to_ptr.hbm [resolvable:$true] %s147
      %153 = dma.vmem_to_hbm [thread:$0]  %s146, 256, %s148, [#allocation4], 128, 128, 8
    $region25: #{tpu_custom_call.1} parent=1 // pred_fallthru
      _
    // Predicated region
    $region26: #{tpu_custom_call.1} parent=1 // pred_check
      _
    $region27: #{tpu_custom_call.1} parent=1 // pred_check_branch
      %155 = sbr.rel (0) target = $region29
    $region28: #{tpu_custom_call.1} parent=1 // pred_region
      %157 = dma.done [#allocation4], 256
    $region29: #{tpu_custom_call.1} parent=1 // pred_fallthru
      _
    %158 = vsyncpa [#allocation3], 1
    %159 = vsyncpa [#allocation6], 1
    %160 = vsyncpa [#allocation4], 1

// kernel: tpu_custom_call.1
$region0: #{tpu_custom_call.1}
  #allocation0 [shape = 'u32[]', space=smem, size = 0x4, offset = 0x4, fixed_abs, tag = 'smem constant byte address 0x4 - core index']
  #allocation1 [shape = 'u32[72,128]{1,0:T(1,128)}', space=vmem, size = 0x9000, scoped, tag = 'internal scratch']
  %s0 = inlined_call_operand.hbm [shape: bf16[16,128], index: 0, kind: input, shape index: {}]
  %s1 = inlined_call_operand.hbm [shape: bf16[128,128], index: 1, kind: input, shape index: {}]
  %s2 = inlined_call_operand.vmem [shape: f32[1,128], index: 2, kind: input, shape index: {}]
  %s3 = inlined_call_operand.hbm [shape: f32[16,128], index: 3, kind: output, shape index: {}]
  %s4 = sld [smem:[#allocation0]]
  $region30: #{tpu_custom_call.1} parent=0
    _
  %s6 = ssub.s32 1, %s4
  %s7 = scalar_select 0, %s6, %s4
  $region1: #{tpu_custom_call.1} parent=0
    #allocation2 [shape = 'u8[4096]{0}', space=vmem, size = 0x1000, scoped, tag = 'input window, operand 0, single buffered']
    #allocation3 [shape = 's32[1]{0}', space=sflag, size = 0x4, scoped, tag = 'scoped memory for tpu_custom_call.1']
    #allocation4 [shape = 's32[1]{0}', space=sflag, size = 0x4, scoped, tag = 'scoped memory for tpu_custom_call.1']
    #allocation5 [shape = 'u8[32768]{0}', space=vmem, size = 0x8000, scoped, tag = 'input window, operand 1, single buffered']
    #allocation6 [shape = 's32[1]{0}', space=sflag, size = 0x4, scoped, tag = 'scoped memory for tpu_custom_call.1']
    #allocation7 [shape = 'u8[8192]{0}', space=vmem, size = 0x2000, scoped, tag = 'output window, operand 0, single buffered']
    %8 = vsyncpa [#allocation3], 0
    %9 = vsyncpa [#allocation6], 0
    %10 = vsyncpa [#allocation4], 0
    // Predicated region
    $region2: #{tpu_custom_call.1} parent=1 // pred_check
      _
    $region3: #{tpu_custom_call.1} parent=1 // pred_check_branch
      %12 = sbr.rel (0) target = $region5
    $region4: #{tpu_custom_call.1} parent=1 // pred_region
      %14 = vsyncadd [#allocation3], 0
      %s15 = sshll.u32 %s0, 4
      %s16 = int_to_ptr.hbm [resolvable:$true] %s15
      %s17 = sshll.u32 [#allocation2], 4
      %s18 = int_to_ptr.vmem [resolvable:$true] %s17
      %23 = dma.hbm_to_vmem [thread:$0]  %s16, 128, %s18, [#allocation3], 64, 64, 4
    $region5: #{tpu_custom_call.1} parent=1 // pred_fallthru
      _
    // Predicated region
    $region6: #{tpu_custom_call.1} parent=1 // pred_check
      _
    $region7: #{tpu_custom_call.1} parent=1 // pred_check_branch
      %25 = sbr.rel (0) target = $region9
    $region8: #{tpu_custom_call.1} parent=1 // pred_region
      %27 = vsyncadd [#allocation6], 0
      %s28 = sshll.u32 %s1, 4
      %s29 = int_to_ptr.hbm [resolvable:$true] %s28
      %s30 = sshll.u32 [#allocation5], 4
      %s31 = int_to_ptr.vmem [resolvable:$true] %s30
      %36 = dma.hbm_to_vmem [thread:$0]  %s29, 1024, %s31, [#allocation6], 64, 64, 4
    $region9: #{tpu_custom_call.1} parent=1 // pred_fallthru
      _
    // Predicated region
    $region10: #{tpu_custom_call.1} parent=1 // pred_check
      _
    $region11: #{tpu_custom_call.1} parent=1 // pred_check_branch
      %38 = sbr.rel (0) target = $region13
    $region12: #{tpu_custom_call.1} parent=1 // pred_region
      _
    $region13: #{tpu_custom_call.1} parent=1 // pred_fallthru
      _
    // Predicated region
    $region14: #{tpu_custom_call.1} parent=1 // pred_check
      _
    $region15: #{tpu_custom_call.1} parent=1 // pred_check_branch
      %40 = sbr.rel (0) target = $region17
    $region16: #{tpu_custom_call.1} parent=1 // pred_region
      %42 = dma.done [#allocation3], 128
    $region17: #{tpu_custom_call.1} parent=1 // pred_fallthru
      _
    // Predicated region
    $region18: #{tpu_custom_call.1} parent=1 // pred_check
      _
    $region19: #{tpu_custom_call.1} parent=1 // pred_check_branch
      %44 = sbr.rel (0) target = $region21
    $region20: #{tpu_custom_call.1} parent=1 // pred_region
      %46 = dma.done [#allocation6], 1024
    $region21: #{tpu_custom_call.1} parent=1 // pred_fallthru
      _
    %v47 = vld [vmem:[#allocation2] sm:$0xf]
    %v48 = vld [vmem:[#allocation2 + $0x4] sm:$0xf]
    %v49 = vld [vmem:[#allocation5] sm:$0xf]
    %v50 = vld [vmem:[#allocation5 + $0x4] sm:$0xf]
    %v51 = vld [vmem:[#allocation5 + $0x8] sm:$0xf]
    %v52 = vld [vmem:[#allocation5 + $0xc] sm:$0xf]
    %v53 = vld [vmem:[#allocation5 + $0x10] sm:$0xf]
    %v54 = vld [vmem:[#allocation5 + $0x14] sm:$0xf]
    %v55 = vld [vmem:[#allocation5 + $0x18] sm:$0xf]
    %v56 = vld [vmem:[#allocation5 + $0x1c] sm:$0xf]
    %v57 = vld [vmem:[#allocation5 + $0x20] sm:$0xf]
    %v58 = vld [vmem:[#allocation5 + $0x24] sm:$0xf]
    %v59 = vld [vmem:[#allocation5 + $0x28] sm:$0xf]
    %v60 = vld [vmem:[#allocation5 + $0x2c] sm:$0xf]
    %v61 = vld [vmem:[#allocation5 + $0x30] sm:$0xf]
    %v62 = vld [vmem:[#allocation5 + $0x34] sm:$0xf]
    %v63 = vld [vmem:[#allocation5 + $0x38] sm:$0xf]
    %v64 = vld [vmem:[#allocation5 + $0x3c] sm:$0xf]
    %v65 = vld [vmem:[%s2] sm:$0x1]
    %v67 = vperm.slane %v65, 0
    %v71 = vunpack.c.l.b16 %v47
    %v72 = vunpack.c.l.b16 %v48
    %v73 = vpack.c.b16 %v72, %v71
    %v91 = vunpack.c.l.b16 %v49
    %v92 = vunpack.c.l.b16 %v50
    %v93 = vunpack.c.l.b16 %v51
    %v94 = vunpack.c.l.b16 %v52
    %v95 = vunpack.c.l.b16 %v53
    %v96 = vunpack.c.l.b16 %v54
    %v97 = vunpack.c.l.b16 %v55
    %v98 = vunpack.c.l.b16 %v56
    %v99 = vunpack.c.l.b16 %v57
    %v100 = vunpack.c.l.b16 %v58
    %v101 = vunpack.c.l.b16 %v59
    %v102 = vunpack.c.l.b16 %v60
    %v103 = vunpack.c.l.b16 %v61
    %v104 = vunpack.c.l.b16 %v62
    %v105 = vunpack.c.l.b16 %v63
    %v106 = vunpack.c.l.b16 %v64
    %v107 = vpack.c.b16 %v92, %v91
    %v108 = vpack.c.b16 %v94, %v93
    %v109 = vpack.c.b16 %v96, %v95
    %v110 = vpack.c.b16 %v98, %v97
    %v111 = vpack.c.b16 %v100, %v99
    %v112 = vpack.c.b16 %v102, %v101
    %v113 = vpack.c.b16 %v104, %v103
    %v114 = vpack.c.b16 %v106, %v105
    %123 = vmatpush.bf16.msra.mxu0 %v114
    %124 = vmatpush.bf16.msra.mxu0 %v113
    %125 = vmatpush.bf16.msra.mxu0 %v112
    %126 = vmatpush.bf16.msra.mxu0 %v111
    %127 = vmatpush.bf16.msra.mxu0 %v110
    %128 = vmatpush.bf16.msra.mxu0 %v109
    %129 = vmatpush.bf16.msra.mxu0 %v108
    %130 = vmatpush.bf16.msra.mxu0 %v107
    %131 = vmatmul.bf16.gmra.mxu0 %v73
    %v132 = vpop.f32.mrf.mxu0
    %v133 = vadd.f32 %v67, %v132
    %v134 = vpop.f32.mrf.mxu0
    %v135 = vadd.f32 %v67, %v134
    %136 = vdwg.mxu0
    %v137 = vmax.f32 %v133, 0.0
    %v138 = vmax.f32 %v135, 0.0
    %139 = vst [vmem:[#allocation7] sm:$0xff] %v137
    %140 = vst [vmem:[#allocation7 + $0x8] sm:$0xff] %v138
    // Predicated region
    $region22: #{tpu_custom_call.1} parent=1 // pred_check
      _
    $region23: #{tpu_custom_call.1} parent=1 // pred_check_branch
      %142 = sbr.rel (0) target = $region25
    $region24: #{tpu_custom_call.1} parent=1 // pred_region
      %144 = vsyncadd [#allocation4], 0
      %s145 = sshll.u32 [#allocation7], 4
      %s146 = int_to_ptr.vmem [resolvable:$true] %s145
      %s147 = sshll.u32 %s3, 4
      %s148 = int_to_ptr.hbm [resolvable:$true] %s147
      %153 = dma.vmem_to_hbm [thread:$0]  %s146, 256, %s148, [#allocation4], 128, 128, 8
    $region25: #{tpu_custom_call.1} parent=1 // pred_fallthru
      _
    // Predicated region
    $region26: #{tpu_custom_call.1} parent=1 // pred_check
      _
    $region27: #{tpu_custom_call.1} parent=1 // pred_check_branch
      %155 = sbr.rel (0) target = $region29
    $region28: #{tpu_custom_call.1} parent=1 // pred_region
      %157 = dma.done [#allocation4], 256
    $region29: #{tpu_custom_call.1} parent=1 // pred_fallthru
      _
    %158 = vsyncpa [#allocation3], 1
    %159 = vsyncpa [#allocation6], 1
    %160 = vsyncpa [#allocation4], 1

</llo_original>
